<compile_context>
chip_gen: v6e
topology: v6e:2x2x1
jax: 0.10.0
libtpu: 0.0.40
codegen_flags: <defaults>
</compile_context>

<pallas_src>
import functools

import numpy as np
import jax
import jax.numpy as jnp
from jax.experimental import pallas as pl
from jax.experimental.pallas import tpu as pltpu

_MiB = 1024 * 1024


def _round_up(x: int, m: int) -> int:
    return (x + m - 1) // m * m


@functools.lru_cache(maxsize=1)
def _vmem_capacity_bytes() -> int:
    """Per-core VMEM capacity; conservative fallback (v7x = 64 MiB) if unknown."""
    try:
        info = pltpu.get_tpu_info()
        cap = int(getattr(info, "vmem_capacity_bytes", 0))
        if cap > 0:
            return cap
    except Exception:
        pass
    return 64 * _MiB


def _largest_lane_divisor(total_lanes: int, max_lanes: int, min_blocks: int = 1) -> int:
    """Largest m dividing total_lanes with m <= max_lanes and total_lanes//m >= min_blocks."""
    upper = min(max_lanes, total_lanes // max(min_blocks, 1))
    upper = max(1, min(upper, total_lanes))
    best = 1
    for m in range(1, upper + 1):
        if total_lanes % m == 0:
            best = m
    return best


def _sublane_multiple(itemsize: int) -> int:
    # f32: 8 rows / sublane tile, bf16: 16, int8/fp8: 32.
    return {4: 8, 2: 16, 1: 32}.get(itemsize, 8)


# ----------------------------------------------------------------------------
# Kernels
# ----------------------------------------------------------------------------
def _linear_kernel_full_k(x_ref, w_ref, b_ref, o_ref):
    """One (tm, tn) output tile, full K in a single MXU pass. No accumulator needed."""
    acc = jnp.dot(x_ref[...], w_ref[...], preferred_element_type=jnp.float32)
    o_ref[...] = (acc + b_ref[...]).astype(o_ref.dtype)


def _linear_kernel_ktiled(x_ref, w_ref, b_ref, o_ref, acc_ref):
    """One (tm, tn) output tile, reducing over K on grid axis 2.

    k == 0 writes the partial product directly (no broadcast init / extra RMW);
    the bias add is fused into the final cast+store.
    """
    k = pl.program_id(2)
    nk = pl.num_programs(2)
    prod = jnp.dot(x_ref[...], w_ref[...], preferred_element_type=jnp.float32)

    @pl.when(k == 0)
    def _():
        acc_ref[...] = prod

    @pl.when(jnp.logical_and(k > 0, k < nk - 1))
    def _():
        acc_ref[...] += prod

    @pl.when(k == nk - 1)
    def _():
        o_ref[...] = (acc_ref[...] + prod + b_ref[...]).astype(o_ref.dtype)


# ----------------------------------------------------------------------------
# Parameter prep (runs ONCE) + per-call apply
# ----------------------------------------------------------------------------
def make_sparse_input_linear(weight, bias, *, compute_dtype=None, out_dtype=None):
    """Pad + cast the parameters once and return `apply(x) -> x @ W + b`.

    compute_dtype: operand dtype streamed into the MXU (e.g. jnp.bfloat16).
        Accumulation is always f32; output dtype defaults to x.dtype.
        bf16 halves weight HBM traffic and runs at full MXU rate on all of
        v5e/v6e/v7x (numerics differ slightly from the f32 torch reference).
    """
    K, N = weight.shape
    assert bias.shape == (N,), "bias must be (out_dim,)"

    w_dtype = jnp.dtype(compute_dtype) if compute_dtype is not None else jnp.dtype(weight.dtype)
    in_bytes = w_dtype.itemsize

    # Pad unit for K: multiple of 512 when K is large so the K-tiled path has
    # good divisor choices; 128 otherwise (full-K path will be used anyway).
    k_unit = 512 if K > 2048 else 128
    K_p = _round_up(K, k_unit)
    N_p = _round_up(N, 128)

    # ---- one-time cast + pad (hoisted out of the per-call path) -------------
    w_p = weight.astype(w_dtype) if weight.dtype != w_dtype else weight
    if (K_p, N_p) != (K, N):
        w_p = jnp.pad(w_p, ((0, K_p - K), (0, N_p - N)))
    b_p = bias.astype(jnp.float32)
    if N_p != N:
        b_p = jnp.pad(b_p, (0, N_p - N))
    b_p = b_p.reshape(1, N_p)

    cap = _vmem_capacity_bytes()
    # Working-set budget used for tile selection (~21 MiB on v7x, ~43 MiB on v5e/v6e).
    budget = min(cap // 3, 44 * _MiB)

    def apply(x, *, tm=None, tk=None):
        M, Kx = x.shape
        assert Kx == K, f"x has K={Kx}, weight expects K={K}"
        o_dtype = jnp.dtype(out_dtype) if out_dtype is not None else jnp.dtype(x.dtype)
        out_bytes = o_dtype.itemsize

        xc = x.astype(w_dtype) if x.dtype != w_dtype else x

        # ---- M tile (dtype-aware sublane rounding) ---------------------------
        sub = _sublane_multiple(in_bytes)
        if tm is None:
            tm_ = _round_up(M, sub) if M <= 256 else 256
        else:
            tm_ = _round_up(int(tm), sub)
        M_p = _round_up(M, tm_)
        m_tiles = M_p // tm_

        # ---- N tile: <=512, divides N_p; guarantee >=2 blocks along a parallel
        # axis when M is a single tile (keeps both v7x TensorCores busy). -------
        lanes_n = N_p // 128
        want_two = m_tiles == 1
        tn_lanes = _largest_lane_divisor(lanes_n, 4, min_blocks=2 if want_two else 1)
        tn = tn_lanes * 128
        n_tiles = N_p // tn

        # ---- K tiling decision (budget-derived) ------------------------------
        lanes_k = K_p // 128
        full_k_fp = (2 * (tm_ * K_p + K_p * tn) * in_bytes + 2 * tn * 4
                     + 2 * tm_ * tn * out_bytes)
        if tk is not None:
            tk_lanes = _largest_lane_divisor(lanes_k, max(1, int(tk) // 128))
        elif full_k_fp <= budget:
            tk_lanes = lanes_k                      # single MXU pass per output tile
        else:
            fixed = 2 * tm_ * tn * out_bytes + tm_ * tn * 4 + 2 * tn * 4
            per_k_lane = 2 * (tm_ + tn) * 128 * in_bytes
            cap_lanes = max(1, (budget - fixed) // per_k_lane)
            tk_lanes = _largest_lane_divisor(lanes_k, min(cap_lanes, 32))  # tk <= 4096
        tk_ = tk_lanes * 128
        k_tiles = lanes_k // tk_lanes
        use_full_k = k_tiles == 1

        # ---- VMEM limit from the actual (double-buffered) footprint ----------
        if use_full_k:
            footprint = full_k_fp
        else:
            footprint = (2 * (tm_ * tk_ + tk_ * tn) * in_bytes + 2 * tn * 4
                         + 2 * tm_ * tn * out_bytes + tm_ * tn * 4)
        vmem_limit = int(min(cap * 3 // 4,
                             max(32 * _MiB, footprint * 3 // 2 + 8 * _MiB)))

        # ---- pad only the activation ----------------------------------------
        if (M_p, K_p) != (M, K):
            xc = jnp.pad(xc, ((0, M_p - M), (0, K_p - K)))

        flops = 2 * M_p * N_p * K_p

        if use_full_k:
            # Pick grid-axis order so the costlier-to-restream operand is the one
            # whose block index repeats on consecutive steps (DMA skipped).
            mn_bytes = M_p * K_p + m_tiles * K_p * N_p          # M outer, N inner
            nm_bytes = n_tiles * M_p * K_p + K_p * N_p          # N outer, M inner
            order_nm = nm_bytes < mn_bytes
            cost = pl.CostEstimate(
                flops=flops, transcendentals=0,
                bytes_accessed=min(mn_bytes, nm_bytes) * in_bytes
                + N_p * 4 + M_p * N_p * out_bytes)

            if order_nm:
                grid = (n_tiles, m_tiles)
                x_map = lambda j, i: (i, 0)
                w_map = lambda j, i: (0, j)
                b_map = lambda j, i: (0, j)
                o_map = lambda j, i: (i, j)
            else:
                grid = (m_tiles, n_tiles)
                x_map = lambda i, j: (i, 0)
                w_map = lambda i, j: (0, j)
                b_map = lambda i, j: (0, j)
                o_map = lambda i, j: (i, j)

            out_p = pl.pallas_call(
                _linear_kernel_full_k,
                out_shape=jax.ShapeDtypeStruct((M_p, N_p), o_dtype),
                grid_spec=pltpu.PrefetchScalarGridSpec(
                    num_scalar_prefetch=0,
                    grid=grid,
                    in_specs=[
                        pl.BlockSpec((tm_, K_p), x_map),   # x tile (full K)
                        pl.BlockSpec((K_p, tn), w_map),    # weight tile (full K)
                        pl.BlockSpec((1, tn), b_map),      # bias tile
                    ],
                    out_specs=pl.BlockSpec((tm_, tn), o_map),
                ),
                compiler_params=pltpu.CompilerParams(
                    dimension_semantics=("parallel", "parallel"),
                    vmem_limit_bytes=vmem_limit,
                ),
                cost_estimate=cost,
            )(xc, w_p, b_p)
        else:
            cost = pl.CostEstimate(
                flops=flops, transcendentals=0,
                bytes_accessed=(n_tiles * M_p * K_p + m_tiles * K_p * N_p) * in_bytes
                + N_p * 4 + M_p * N_p * out_bytes)

            out_p = pl.pallas_call(
                _linear_kernel_ktiled,
                out_shape=jax.ShapeDtypeStruct((M_p, N_p), o_dtype),
                grid_spec=pltpu.PrefetchScalarGridSpec(
                    num_scalar_prefetch=0,
                    grid=(m_tiles, n_tiles, k_tiles),
                    in_specs=[
                        pl.BlockSpec((tm_, tk_), lambda i, j, k: (i, k)),
                        pl.BlockSpec((tk_, tn), lambda i, j, k: (k, j)),
                        pl.BlockSpec((1, tn), lambda i, j, k: (0, j)),
                    ],
                    out_specs=pl.BlockSpec((tm_, tn), lambda i, j, k: (i, j)),
                    scratch_shapes=[pltpu.VMEM((tm_, tn), jnp.float32)],
                ),
                compiler_params=pltpu.CompilerParams(
                    dimension_semantics=("parallel", "parallel", "arbitrary"),
                    vmem_limit_bytes=vmem_limit,
                ),
                cost_estimate=cost,
            )(xc, w_p, b_p)

        if (M_p, N_p) != (M, N):
            out_p = out_p[:M, :N]
        return out_p

    return apply


def sparse_input_linear(x, weight, bias, *, compute_dtype=None, out_dtype=None,
                        tm=None, tk=None):
    """One-shot convenience wrapper (re-pads the params on every call).

    For repeated application of the same layer, prefer make_sparse_input_linear
    so the weight/bias padding + cast happen once.
    """
    return make_sparse_input_linear(weight, bias, compute_dtype=compute_dtype,
                                    out_dtype=out_dtype)(x, tm=tm, tk=tk)


def init_params(key, inp_dim, out_dim):
    """Deterministic re-implementation of SparseInputLinear.reset_parameters."""
    stdv = 1.0 / np.sqrt(out_dim)  # weight.size(1) == out_dim
    kw, kb = jax.random.split(key)
    weight = jax.random.uniform(
        kw, (inp_dim, out_dim), minval=-stdv, maxval=stdv, dtype=jnp.float32)
    bias = jax.random.uniform(
        kb, (out_dim,), minval=-stdv, maxval=stdv, dtype=jnp.float32)
    return weight, bias


if __name__ == "__main__":
    key = jax.random.PRNGKey(0)
    kx, kp, kx2 = jax.random.split(key, 3)

    # Small synthetic shapes consistent with forward(x): x [M, inp_dim].
    # Non-multiples of 128 exercise the padding paths.
    M, inp_dim, out_dim = 16, 300, 96
    x = jax.random.normal(kx, (M, inp_dim), dtype=jnp.float32)
    weight, bias = init_params(kp, inp_dim, out_dim)
    ref = x @ weight + bias

    # Prepare params once (pad + cast hoisted out of the per-call path).
    layer = make_sparse_input_linear(weight, bias)

    # Default path: full-K single-pass kernel (no reduction grid axis).
    out = jax.block_until_ready(layer(x))
    np.testing.assert_allclose(np.asarray(out), np.asarray(ref), rtol=1e-5, atol=1e-5)

    # Force the K-tiled reduction path (bias fused into the final store) for coverage.
    out2 = jax.block_until_ready(layer(x, tk=128))
    np.testing.assert_allclose(np.asarray(out2), np.asarray(ref), rtol=1e-5, atol=1e-5)

    # Larger M: exercises tm=256 tiling and the weight-streamed-once grid ordering.
    M2 = 512
    x2 = jax.random.normal(kx2, (M2, inp_dim), dtype=jnp.float32)
    ref2 = x2 @ weight + bias
    out3 = jax.block_until_ready(layer(x2))
    np.testing.assert_allclose(np.asarray(out3), np.asarray(ref2), rtol=1e-5, atol=1e-5)

    # bf16 operand-stream path (recommended, esp. on v5e); f32 accumulation.
    layer_bf16 = make_sparse_input_linear(weight, bias, compute_dtype=jnp.bfloat16)
    out4 = jax.block_until_ready(layer_bf16(x))
    np.testing.assert_allclose(np.asarray(out4), np.asarray(ref), rtol=5e-2, atol=5e-2)

    print("KERNEL_OK")
</pallas_src>

<mosaic_0001>
module attributes {stable_mosaic.version = 11 : i64} {
  func.func @_linear_kernel_full_k(%arg0: i32, %arg1: i32, %arg2: memref<16x384xf32, #tpu.memory_space<vmem>>, %arg3: memref<384x128xf32, #tpu.memory_space<vmem>>, %arg4: memref<1x128xf32, #tpu.memory_space<vmem>>, %arg5: memref<16x128xf32, #tpu.memory_space<vmem>>) attributes {dimension_semantics = [#tpu.dimension_semantics<parallel>, #tpu.dimension_semantics<parallel>], iteration_bounds = array<i64: 1, 1>, scalar_prefetch = 0 : i64, scratch_operands = 0 : i64, tpu.core_type = #tpu.core_type<tc>, window_params = [{transform_indices = @transform_0, window_bounds = array<i64: 16, 384>}, {transform_indices = @transform_1, window_bounds = array<i64: 384, 128>}, {transform_indices = @transform_2, window_bounds = array<i64: 1, 128>}, {transform_indices = @transform_3, window_bounds = array<i64: 16, 128>}]} {
    %c0 = arith.constant 0 : index
    %c0_0 = arith.constant 0 : index
    %0 = vector.load %arg2[%c0, %c0_0] : memref<16x384xf32, #tpu.memory_space<vmem>>, vector<16x384xf32>
    %c0_1 = arith.constant 0 : index
    %c0_2 = arith.constant 0 : index
    %1 = vector.load %arg3[%c0_1, %c0_2] : memref<384x128xf32, #tpu.memory_space<vmem>>, vector<384x128xf32>
    %cst = arith.constant dense<0.000000e+00> : vector<16x128xf32>
    %2 = tpu.matmul %0, %1, %cst {dimension_numbers = #tpu.dot_dimension_numbers<[1], [0], [0], [1], [0, 0, 1, 1], [], []>} : vector<16x384xf32>, vector<384x128xf32>, vector<16x128xf32> -> vector<16x128xf32>
    %c0_3 = arith.constant 0 : index
    %c0_4 = arith.constant 0 : index
    %3 = vector.load %arg4[%c0_3, %c0_4] : memref<1x128xf32, #tpu.memory_space<vmem>>, vector<1x128xf32>
    %4 = vector.broadcast %3 : vector<1x128xf32> to vector<16x128xf32>
    %5 = arith.addf %2, %4 : vector<16x128xf32>
    %c0_5 = arith.constant 0 : index
    %c0_6 = arith.constant 0 : index
    %6 = vector.load %arg5[%c0_5, %c0_6] : memref<16x128xf32, #tpu.memory_space<vmem>>, vector<16x128xf32>
    tpu.vector_store %arg5[%c0_5, %c0_6], %5 {strides = array<i32>} : memref<16x128xf32, #tpu.memory_space<vmem>>, vector<16x128xf32>,
    return
  }
  func.func @transform_0(%arg0: i32, %arg1: i32) -> (i32, i32) {
    %c0_i32 = arith.constant 0 : i32
    %c0_i32_0 = arith.constant 0 : i32
    return %arg0, %c0_i32 : i32, i32
  }
  func.func @transform_1(%arg0: i32, %arg1: i32) -> (i32, i32) {
    %c0_i32 = arith.constant 0 : i32
    %c0_i32_0 = arith.constant 0 : i32
    return %c0_i32, %arg1 : i32, i32
  }
  func.func @transform_2(%arg0: i32, %arg1: i32) -> (i32, i32) {
    %c0_i32 = arith.constant 0 : i32
    %c0_i32_0 = arith.constant 0 : i32
    return %c0_i32, %arg1 : i32, i32
  }
  func.func @transform_3(%arg0: i32, %arg1: i32) -> (i32, i32) {
    %c0_i32 = arith.constant 0 : i32
    return %arg0, %arg1 : i32, i32
  }
}

</mosaic_0001>

<llo_original>
// kernel: tpu_custom_call.1
$region0: #{tpu_custom_call.1}
  #allocation0 [shape = 'u32[]', space=smem, size = 0x4, offset = 0x4, fixed_abs, tag = 'smem constant byte address 0x4 - core index']
  #allocation1 [shape = 'u32[144,128]{1,0:T(1,128)}', space=vmem, size = 0x12000, scoped, tag = 'internal scratch']
  %s0 = inlined_call_operand.hbm [shape: f32[16,384], index: 0, kind: input, shape index: {}]
  %s1 = inlined_call_operand.hbm [shape: f32[384,128], index: 1, kind: input, shape index: {}]
  %s2 = inlined_call_operand.vmem [shape: f32[1,128], index: 2, kind: input, shape index: {}]
  %s3 = inlined_call_operand.hbm [shape: f32[16,128], index: 3, kind: output, shape index: {}]
  %s4 = sld [smem:[#allocation0]]
  $region30: #{tpu_custom_call.1} parent=0
    _
  %s6 = ssub.s32 1, %s4
  %s7 = scalar_select 0, %s6, %s4
  $region1: #{tpu_custom_call.1} parent=0
    #allocation2 [shape = 'u8[24576]{0}', space=vmem, size = 0x6000, scoped, tag = 'input window, operand 0, single buffered']
    #allocation3 [shape = 's32[1]{0}', space=sflag, size = 0x4, scoped, tag = 'scoped memory for tpu_custom_call.1']
    #allocation4 [shape = 's32[1]{0}', space=sflag, size = 0x4, scoped, tag = 'scoped memory for tpu_custom_call.1']
    #allocation5 [shape = 'u8[196608]{0}', space=vmem, size = 0x30000, scoped, tag = 'input window, operand 1, single buffered']
    #allocation6 [shape = 's32[1]{0}', space=sflag, size = 0x4, scoped, tag = 'scoped memory for tpu_custom_call.1']
    #allocation7 [shape = 'u8[8192]{0}', space=vmem, size = 0x2000, scoped, tag = 'output window, operand 0, single buffered']
    %8 = vsyncpa [#allocation3], 0
    %9 = vsyncpa [#allocation6], 0
    %10 = vsyncpa [#allocation4], 0
    // Predicated region
    $region2: #{tpu_custom_call.1} parent=1 // pred_check
      _
    $region3: #{tpu_custom_call.1} parent=1 // pred_check_branch
      %12 = sbr.rel (0) target = $region5
    $region4: #{tpu_custom_call.1} parent=1 // pred_region
      %s14 = ssub.s32 768, 768
      %15 = vsyncadd [#allocation3], %s14
      %s16 = sshll.u32 [#allocation2], 4
      %s17 = int_to_ptr.vmem [resolvable:$true] %s16
      %22 = dma.hbm_to_vmem [thread:$0]  %s0, 768, %s17, [#allocation3], 384, 384, 24
    $region5: #{tpu_custom_call.1} parent=1 // pred_fallthru
      _
    // Predicated region
    $region6: #{tpu_custom_call.1} parent=1 // pred_check
      _
    $region7: #{tpu_custom_call.1} parent=1 // pred_check_branch
      %24 = sbr.rel (0) target = $region9
    $region8: #{tpu_custom_call.1} parent=1 // pred_region
      %s26 = ssub.s32 6144, 6144
      %27 = vsyncadd [#allocation6], %s26
      %s28 = sshll.u32 [#allocation5], 4
      %s29 = int_to_ptr.vmem [resolvable:$true] %s28
      %34 = dma.hbm_to_vmem [thread:$0]  %s1, 6144, %s29, [#allocation6], 128, 128, 8
    $region9: #{tpu_custom_call.1} parent=1 // pred_fallthru
      _
    // Predicated region
    $region10: #{tpu_custom_call.1} parent=1 // pred_check
      _
    $region11: #{tpu_custom_call.1} parent=1 // pred_check_branch
      %36 = sbr.rel (0) target = $region13
    $region12: #{tpu_custom_call.1} parent=1 // pred_region
      _
    $region13: #{tpu_custom_call.1} parent=1 // pred_fallthru
      _
    // Predicated region
    $region14: #{tpu_custom_call.1} parent=1 // pred_check
      _
    $region15: #{tpu_custom_call.1} parent=1 // pred_check_branch
      %38 = sbr.rel (0) target = $region17
    $region16: #{tpu_custom_call.1} parent=1 // pred_region
      %39 = dma.done [#allocation3], 768
    $region17: #{tpu_custom_call.1} parent=1 // pred_fallthru
      _
    // Predicated region
    $region18: #{tpu_custom_call.1} parent=1 // pred_check
      _
    $region19: #{tpu_custom_call.1} parent=1 // pred_check_branch
      %41 = sbr.rel (0) target = $region21
    $region20: #{tpu_custom_call.1} parent=1 // pred_region
      %42 = dma.done [#allocation6], 6144
    $region21: #{tpu_custom_call.1} parent=1 // pred_fallthru
      _
    %v43 = vld [vmem:[#allocation2] sm:$0xff]
    %v44 = vld [vmem:[#allocation2 + $0x8] sm:$0xff]
    %v45 = vld [vmem:[#allocation2 + $0x10] sm:$0xff]
    %v46 = vld [vmem:[#allocation2 + $0x18] sm:$0xff]
    %v47 = vld [vmem:[#allocation2 + $0x20] sm:$0xff]
    %v48 = vld [vmem:[#allocation2 + $0x28] sm:$0xff]
    %v49 = vld [vmem:[#allocation5] sm:$0xff]
    %v50 = vld [vmem:[#allocation5 + $0x8] sm:$0xff]
    %v51 = vld [vmem:[#allocation5 + $0x10] sm:$0xff]
    %v52 = vld [vmem:[#allocation5 + $0x18] sm:$0xff]
    %v53 = vld [vmem:[#allocation5 + $0x20] sm:$0xff]
    %v54 = vld [vmem:[#allocation5 + $0x28] sm:$0xff]
    %v55 = vld [vmem:[#allocation5 + $0x30] sm:$0xff]
    %v56 = vld [vmem:[#allocation5 + $0x38] sm:$0xff]
    %v57 = vld [vmem:[#allocation5 + $0x40] sm:$0xff]
    %v58 = vld [vmem:[#allocation5 + $0x48] sm:$0xff]
    %v59 = vld [vmem:[#allocation5 + $0x50] sm:$0xff]
    %v60 = vld [vmem:[#allocation5 + $0x58] sm:$0xff]
    %v61 = vld [vmem:[#allocation5 + $0x60] sm:$0xff]
    %v62 = vld [vmem:[#allocation5 + $0x68] sm:$0xff]
    %v63 = vld [vmem:[#allocation5 + $0x70] sm:$0xff]
    %v64 = vld [vmem:[#allocation5 + $0x78] sm:$0xff]
    %v65 = vld [vmem:[#allocation5 + $0x80] sm:$0xff]
    %v66 = vld [vmem:[#allocation5 + $0x88] sm:$0xff]
    %v67 = vld [vmem:[#allocation5 + $0x90] sm:$0xff]
    %v68 = vld [vmem:[#allocation5 + $0x98] sm:$0xff]
    %v69 = vld [vmem:[#allocation5 + $0xa0] sm:$0xff]
    %v70 = vld [vmem:[#allocation5 + $0xa8] sm:$0xff]
    %v71 = vld [vmem:[#allocation5 + $0xb0] sm:$0xff]
    %v72 = vld [vmem:[#allocation5 + $0xb8] sm:$0xff]
    %v73 = vld [vmem:[#allocation5 + $0xc0] sm:$0xff]
    %v74 = vld [vmem:[#allocation5 + $0xc8] sm:$0xff]
    %v75 = vld [vmem:[#allocation5 + $0xd0] sm:$0xff]
    %v76 = vld [vmem:[#allocation5 + $0xd8] sm:$0xff]
    %v77 = vld [vmem:[#allocation5 + $0xe0] sm:$0xff]
    %v78 = vld [vmem:[#allocation5 + $0xe8] sm:$0xff]
    %v79 = vld [vmem:[#allocation5 + $0xf0] sm:$0xff]
    %v80 = vld [vmem:[#allocation5 + $0xf8] sm:$0xff]
    %v81 = vld [vmem:[#allocation5 + $0x100] sm:$0xff]
    %v82 = vld [vmem:[#allocation5 + $0x108] sm:$0xff]
    %v83 = vld [vmem:[#allocation5 + $0x110] sm:$0xff]
    %v84 = vld [vmem:[#allocation5 + $0x118] sm:$0xff]
    %v85 = vld [vmem:[#allocation5 + $0x120] sm:$0xff]
    %v86 = vld [vmem:[#allocation5 + $0x128] sm:$0xff]
    %v87 = vld [vmem:[#allocation5 + $0x130] sm:$0xff]
    %v88 = vld [vmem:[#allocation5 + $0x138] sm:$0xff]
    %v89 = vld [vmem:[#allocation5 + $0x140] sm:$0xff]
    %v90 = vld [vmem:[#allocation5 + $0x148] sm:$0xff]
    %v91 = vld [vmem:[#allocation5 + $0x150] sm:$0xff]
    %v92 = vld [vmem:[#allocation5 + $0x158] sm:$0xff]
    %v93 = vld [vmem:[#allocation5 + $0x160] sm:$0xff]
    %v94 = vld [vmem:[#allocation5 + $0x168] sm:$0xff]
    %v95 = vld [vmem:[#allocation5 + $0x170] sm:$0xff]
    %v96 = vld [vmem:[#allocation5 + $0x178] sm:$0xff]
    %v97 = vld [vmem:[%s2] sm:$0x1]
    %v99 = vlaneseq
    %v100 = vshrl.u32 %v99, 7
    %v101 = vsub.s32 0, %v100
    %v102 = vrot.slane %v97, %v101
    %104 = vmatprep.subr.mxu0 0.0
    %105 = vmatpush1.msra.mxu0 %v64
    %106 = vmatprep.subr.mxu0 0.0
    %107 = vmatpush1.msra.mxu0 %v63
    %108 = vmatprep.subr.mxu0 0.0
    %109 = vmatpush1.msra.mxu0 %v62
    %110 = vmatprep.subr.mxu0 0.0
    %111 = vmatpush1.msra.mxu0 %v61
    %112 = vmatprep.subr.mxu0 0.0
    %113 = vmatpush1.msra.mxu0 %v60
    %114 = vmatprep.subr.mxu0 0.0
    %115 = vmatpush1.msra.mxu0 %v59
    %116 = vmatprep.subr.mxu0 0.0
    %117 = vmatpush1.msra.mxu0 %v58
    %118 = vmatprep.subr.mxu0 0.0
    %119 = vmatpush1.msra.mxu0 %v57
    %120 = vmatprep.subr.mxu0 0.0
    %121 = vmatpush1.msra.mxu0 %v56
    %122 = vmatprep.subr.mxu0 0.0
    %123 = vmatpush1.msra.mxu0 %v55
    %124 = vmatprep.subr.mxu0 0.0
    %125 = vmatpush1.msra.mxu0 %v54
    %126 = vmatprep.subr.mxu0 0.0
    %127 = vmatpush1.msra.mxu0 %v53
    %128 = vmatprep.subr.mxu0 0.0
    %129 = vmatpush1.msra.mxu0 %v52
    %130 = vmatprep.subr.mxu0 0.0
    %131 = vmatpush1.msra.mxu0 %v51
    %132 = vmatprep.subr.mxu0 0.0
    %133 = vmatpush1.msra.mxu0 %v50
    %134 = vmatprep.subr.mxu0 0.0
    %135 = vmatpush1.msra.mxu0 %v49
    %136 = vmatprep.subr.mxu0 0.0
    %137 = vmatpush2.msra.mxu0 %v80
    %138 = vmatprep.subr.mxu0 0.0
    %139 = vmatpush2.msra.mxu0 %v79
    %140 = vmatprep.subr.mxu0 0.0
    %141 = vmatpush2.msra.mxu0 %v78
    %142 = vmatprep.subr.mxu0 0.0
    %143 = vmatpush2.msra.mxu0 %v77
    %144 = vmatprep.subr.mxu0 0.0
    %145 = vmatpush2.msra.mxu0 %v76
    %146 = vmatprep.subr.mxu0 0.0
    %147 = vmatpush2.msra.mxu0 %v75
    %148 = vmatprep.subr.mxu0 0.0
    %149 = vmatpush2.msra.mxu0 %v74
    %150 = vmatprep.subr.mxu0 0.0
    %151 = vmatpush2.msra.mxu0 %v73
    %152 = vmatprep.subr.mxu0 0.0
    %153 = vmatpush2.msra.mxu0 %v72
    %154 = vmatprep.subr.mxu0 0.0
    %155 = vmatpush2.msra.mxu0 %v71
    %156 = vmatprep.subr.mxu0 0.0
    %157 = vmatpush2.msra.mxu0 %v70
    %158 = vmatprep.subr.mxu0 0.0
    %159 = vmatpush2.msra.mxu0 %v69
    %160 = vmatprep.subr.mxu0 0.0
    %161 = vmatpush2.msra.mxu0 %v68
    %162 = vmatprep.subr.mxu0 0.0
    %163 = vmatpush2.msra.mxu0 %v67
    %164 = vmatprep.subr.mxu0 0.0
    %165 = vmatpush2.msra.mxu0 %v66
    %166 = vmatprep.subr.mxu0 0.0
    %167 = vmatpush2.msra.mxu0 %v65
    %168 = vmatprep.mubr.f32.mxu0 %v44
    %169 = vmatmul.mubr.f32.gmra.mxu0 %v43
    %v170 = vpop.f32.mrf.mxu0
    %v171 = vadd.f32 %v102, %v170
    %v172 = vpop.f32.mrf.mxu0
    %173 = vmatprep.mubr.f32.mxu0 %v47
    %174 = vmatmul.mubr.f32.gmra.mxu0 %v46
    %v175 = vpop.f32.mrf.mxu0
    %v176 = vadd.f32 %v102, %v175
    %v177 = vpop.f32.mrf.mxu0
    %178 = vdwg.mxu0
    %179 = vmatprep.subr.mxu0 0.0
    %180 = vmatpush1.msra.mxu0 %v96
    %181 = vmatprep.subr.mxu0 0.0
    %182 = vmatpush1.msra.mxu0 %v95
    %183 = vmatprep.subr.mxu0 0.0
    %184 = vmatpush1.msra.mxu0 %v94
    %185 = vmatprep.subr.mxu0 0.0
    %186 = vmatpush1.msra.mxu0 %v93
    %187 = vmatprep.subr.mxu0 0.0
    %188 = vmatpush1.msra.mxu0 %v92
    %189 = vmatprep.subr.mxu0 0.0
    %190 = vmatpush1.msra.mxu0 %v91
    %191 = vmatprep.subr.mxu0 0.0
    %192 = vmatpush1.msra.mxu0 %v90
    %193 = vmatprep.subr.mxu0 0.0
    %194 = vmatpush1.msra.mxu0 %v89
    %195 = vmatprep.subr.mxu0 0.0
    %196 = vmatpush1.msra.mxu0 %v88
    %197 = vmatprep.subr.mxu0 0.0
    %198 = vmatpush1.msra.mxu0 %v87
    %199 = vmatprep.subr.mxu0 0.0
    %200 = vmatpush1.msra.mxu0 %v86
    %201 = vmatprep.subr.mxu0 0.0
    %202 = vmatpush1.msra.mxu0 %v85
    %203 = vmatprep.subr.mxu0 0.0
    %204 = vmatpush1.msra.mxu0 %v84
    %205 = vmatprep.subr.mxu0 0.0
    %206 = vmatpush1.msra.mxu0 %v83
    %207 = vmatprep.subr.mxu0 0.0
    %208 = vmatpush1.msra.mxu0 %v82
    %209 = vmatprep.subr.mxu0 0.0
    %210 = vmatpush1.msra.mxu0 %v81
    %211 = vmatprep.subr.mxu0 0.0
    %212 = vmatpush2.msra.mxu0 0.0
    %213 = vmatprep.subr.mxu0 0.0
    %214 = vmatpush2.msra.mxu0 0.0
    %215 = vmatprep.subr.mxu0 0.0
    %216 = vmatpush2.msra.mxu0 0.0
    %217 = vmatprep.subr.mxu0 0.0
    %218 = vmatpush2.msra.mxu0 0.0
    %219 = vmatprep.subr.mxu0 0.0
    %220 = vmatpush2.msra.mxu0 0.0
    %221 = vmatprep.subr.mxu0 0.0
    %222 = vmatpush2.msra.mxu0 0.0
    %223 = vmatprep.subr.mxu0 0.0
    %224 = vmatpush2.msra.mxu0 0.0
    %225 = vmatprep.subr.mxu0 0.0
    %226 = vmatpush2.msra.mxu0 0.0
    %227 = vmatprep.subr.mxu0 0.0
    %228 = vmatpush2.msra.mxu0 0.0
    %229 = vmatprep.subr.mxu0 0.0
    %230 = vmatpush2.msra.mxu0 0.0
    %231 = vmatprep.subr.mxu0 0.0
    %232 = vmatpush2.msra.mxu0 0.0
    %233 = vmatprep.subr.mxu0 0.0
    %234 = vmatpush2.msra.mxu0 0.0
    %235 = vmatprep.subr.mxu0 0.0
    %236 = vmatpush2.msra.mxu0 0.0
    %237 = vmatprep.subr.mxu0 0.0
    %238 = vmatpush2.msra.mxu0 0.0
    %239 = vmatprep.subr.mxu0 0.0
    %240 = vmatpush2.msra.mxu0 0.0
    %241 = vmatprep.subr.mxu0 0.0
    %242 = vmatpush2.msra.mxu0 0.0
    %243 = vmatprep.mubr.f32.mxu0 0.0
    %244 = vmatmul.mubr.f32.gmra.mxu0 %v45
    %v245 = vpop.f32.mrf.mxu0
    %v246 = vadd.f32 %v171, %v245
    %v247 = vpop.f32.mrf.mxu0
    %248 = vmatprep.mubr.f32.mxu0 0.0
    %249 = vmatmul.mubr.f32.gmra.mxu0 %v48
    %v250 = vpop.f32.mrf.mxu0
    %v251 = vadd.f32 %v176, %v250
    %v252 = vpop.f32.mrf.mxu0
    %253 = vdwg.mxu0
    %254 = vst [vmem:[#allocation7] sm:$0xff] %v246
    %255 = vst [vmem:[#allocation7 + $0x8] sm:$0xff] %v251
    // Predicated region
    $region22: #{tpu_custom_call.1} parent=1 // pred_check
      _
    $region23: #{tpu_custom_call.1} parent=1 // pred_check_branch
      %257 = sbr.rel (0) target = $region25
    $region24: #{tpu_custom_call.1} parent=1 // pred_region
      %s259 = ssub.s32 256, 256
      %260 = vsyncadd [#allocation4], %s259
      %s261 = sshll.u32 [#allocation7], 4
      %s262 = int_to_ptr.vmem [resolvable:$true] %s261
      %267 = dma.vmem_to_hbm [thread:$0]  %s262, 256, %s3, [#allocation4], 128, 128, 8
    $region25: #{tpu_custom_call.1} parent=1 // pred_fallthru
      _
    // Predicated region
    $region26: #{tpu_custom_call.1} parent=1 // pred_check
      _
    $region27: #{tpu_custom_call.1} parent=1 // pred_check_branch
      %269 = sbr.rel (0) target = $region29
    $region28: #{tpu_custom_call.1} parent=1 // pred_region
      %270 = dma.done [#allocation4], 256
    $region29: #{tpu_custom_call.1} parent=1 // pred_fallthru
      _
    %271 = vsyncpa [#allocation3], 1
    %272 = vsyncpa [#allocation6], 1
    %273 = vsyncpa [#allocation4], 1

</llo_original>
